<compile_context>
chip_gen: v5e
topology: v5e:2x2
jax: 0.10.0
libtpu: 0.0.40
codegen_flags: <defaults>
</compile_context>

<pallas_src>
import math

import jax
import jax.numpy as jnp
from jax.experimental import pallas as pl
from jax.experimental.pallas import tpu as pltpu


# ------------------------- kernel -------------------------

def adaptive_attention_pooling_kernel(
    x_ref,        # [Bt, S, H]   input tile
    amask_ref,    # [Bt, S, 1]   additive mask (0 where valid, -1e9 where padded)
    w_all_ref,    # [H, A_tot]   lane-concatenated branch projection weights
    b_all_ref,    # [1, A_tot]   concatenated branch projection biases
    v_blk_ref,    # [A_tot, NB]  block-structured branch attention vectors (lane-sparse)
    fw_ref,       # [NB*H, H]    fusion weight; branch-k rows live at [k*H:(k+1)*H]
    fb_ref,       # [1, H]       fusion bias
    out_ref,      # [Bt, H]
):
    Bt, S, H = x_ref.shape
    NB = v_blk_ref.shape[1]

    x = x_ref[...]                                   # [Bt, S, H] f32
    x2 = x.reshape(Bt * S, H)                        # leading-dim merge, last dim unchanged

    # All three branch projections in a single MXU matmul.
    ah = jnp.tanh(
        jnp.dot(x2, w_all_ref[...], preferred_element_type=jnp.float32)
        + b_all_ref[...]
    )                                                # [Bt*S, A_tot] f32

    # Lane-sparse branch scores (one small matmul, NB=3 output lanes).
    scores = jnp.dot(ah, v_blk_ref[...], preferred_element_type=jnp.float32)  # [Bt*S, NB]
    scores = scores.reshape(Bt, S, NB) + amask_ref[...]   # additive mask, broadcast over lanes

    # Masked softmax over the sequence axis on [Bt, S, NB] only.
    # Denominator is just [Bt, 1, NB] -> exact divide (no approx reciprocal needed).
    m = jnp.max(scores, axis=1, keepdims=True)
    p = jnp.exp(scores - m)
    w = p / jnp.sum(p, axis=1, keepdims=True)        # [Bt, S, NB]
    # NOTE: dropout on the attention weights is identity in eval mode.

    # Weighted-sum pooling for all 3 branches as ONE batched MXU contraction.
    # Tiny minor-dims transpose (3 lanes wide) puts it in canonical batched-matmul form.
    wt = jnp.swapaxes(w, 1, 2).astype(x.dtype)       # [Bt, NB, S]
    pooled = jnp.einsum("bks,bsh->bkh", wt, x,
                        preferred_element_type=jnp.float32)   # [Bt, NB, H]

    # Fusion Linear(NB*H -> H): static unroll over the 3 branches, each a standard
    # 2-D MXU matmul (avoids an in-kernel lane-merging reshape of `pooled`).
    fused = fb_ref[...]                              # [1, H], broadcasts on first add
    for k in range(NB):
        fused = fused + jnp.dot(
            pooled[:, k, :],
            fw_ref[k * H:(k + 1) * H, :],
            preferred_element_type=jnp.float32,
        )
    out_ref[...] = fused.astype(out_ref.dtype)


# ------------------------- wrapper -------------------------

def _pick_batch_tile(B, S, target_rows=512):
    """Largest batch tile giving ~target_rows (= B_tile * S) rows per grid step.

    Falls back to the full batch when B is small; otherwise keeps the tile a
    multiple of 8 so the mask / output block shapes satisfy the (8, 128) rule.
    """
    if B * S <= target_rows:
        return B
    bt = max(8, (target_rows // max(S, 1)) // 8 * 8)
    bt = min(bt, B)
    while bt > 8 and B % bt != 0:
        bt -= 8
    return bt if (bt >= 1 and B % bt == 0) else B


def adaptive_attention_pooling(x, mask, params, *, batch_tile=None):
    """Forward pass of AdaptiveAttentionPooling (eval mode).

    Returns (fused_output [B, H], dim_weights [B, 1]).  dim_weights is computed by the
    original module but does not feed the fused output; it is evaluated as a cheap
    plain-XLA op outside the kernel (keeps the kernel output lane-dense).
    """
    B, S, H = x.shape
    A_tot = params["w_all"].shape[1]
    NB = params["v_blk"].shape[1]

    if batch_tile is None:
        batch_tile = _pick_batch_tile(B, S)
    assert B % batch_tile == 0, (B, batch_tile)

    x = x.astype(jnp.float32)
    # Additive mask computed once in the wrapper: 0 where valid, -1e9 where padded.
    amask = jnp.where(mask.astype(jnp.float32) < 0.5,
                      jnp.float32(-1e9), jnp.float32(0.0))[:, :, None]   # [B, S, 1]

    fused = pl.pallas_call(
        adaptive_attention_pooling_kernel,
        out_shape=jax.ShapeDtypeStruct((B, H), jnp.float32),
        grid=(B // batch_tile,),
        in_specs=[
            pl.BlockSpec((batch_tile, S, H), lambda i: (i, 0, 0)),   # x: batch-tiled
            pl.BlockSpec((batch_tile, S, 1), lambda i: (i, 0, 0)),   # additive mask
            pl.BlockSpec((H, A_tot), lambda i: (0, 0)),              # weights: untiled
            pl.BlockSpec((1, A_tot), lambda i: (0, 0)),
            pl.BlockSpec((A_tot, NB), lambda i: (0, 0)),
            pl.BlockSpec((NB * H, H), lambda i: (0, 0)),
            pl.BlockSpec((1, H), lambda i: (0, 0)),
        ],
        out_specs=pl.BlockSpec((batch_tile, H), lambda i: (i, 0)),
        compiler_params=pltpu.CompilerParams(
            dimension_semantics=("parallel",),
            vmem_limit_bytes=32 * 1024 * 1024,   # safe on v5e/v6e and v7x (64 MiB VMEM)
        ),
    )(x, amask, params["w_all"], params["b_all"], params["v_blk"],
      params["fw"], params["fb"])

    # dim_predictor (dead w.r.t. the fused output in the original forward) -- plain XLA.
    maskf = mask.astype(jnp.float32)
    seq_repr = jnp.sum(x * maskf[:, :, None], axis=1) / jnp.sum(maskf, axis=1, keepdims=True)
    h1 = jnp.maximum(seq_repr @ params["dpw1"] + params["dpb1"], 0.0)
    dim_w = jax.nn.sigmoid(h1 @ params["dpw2"] + params["dpb2"])
    # TODO(synk): dropout layers are omitted (identity in eval mode); no training-mode path.
    return fused, dim_w


# ------------------------- parameter construction -------------------------

def _xavier_uniform(key, fan_in, fan_out, shape):
    bound = math.sqrt(6.0 / (fan_in + fan_out))
    return jax.random.uniform(key, shape, jnp.float32, -bound, bound)


def init_params(key, hidden_dim, attn_dims):
    H = hidden_dim
    Hh = H // 2
    n = len(attn_dims)
    keys = jax.random.split(key, 3 + 2 * n)

    # dim_predictor: Linear(H, H//2) -> ReLU -> Linear(H//2, 1) -> Sigmoid
    dpw1 = _xavier_uniform(keys[0], H, Hh, (H, Hh))
    dpb1 = jnp.zeros((1, Hh), jnp.float32)
    dpw2 = _xavier_uniform(keys[1], Hh, 1, (Hh, 1))
    dpb2 = jnp.zeros((1, 1), jnp.float32)

    # per-branch AttentionPooling params
    branches = []
    for i, A in enumerate(attn_dims):
        w = _xavier_uniform(keys[2 + 2 * i], H, A, (H, A))
        b = jnp.zeros((A,), jnp.float32)
        v = 0.1 * jax.random.normal(keys[3 + 2 * i], (A,), jnp.float32)
        branches.append({"w": w, "b": b, "v": v})

    # fusion: Linear(3H, H) -- distinct key
    fw = _xavier_uniform(keys[2 + 2 * n], n * H, H, (n * H, H))
    fb = jnp.zeros((1, H), jnp.float32)

    # ---- fused kernel-side parameters ----
    w_all = jnp.concatenate([br["w"] for br in branches], axis=1)        # [H, A_tot]
    b_all = jnp.concatenate([br["b"] for br in branches])[None, :]       # [1, A_tot]
    a_tot = w_all.shape[1]
    v_blk = jnp.zeros((a_tot, n), jnp.float32)                           # block-structured, lane-sparse
    off = 0
    for k, br in enumerate(branches):
        A = br["v"].shape[0]
        v_blk = v_blk.at[off:off + A, k].set(br["v"])
        off += A

    return {
        "dpw1": dpw1, "dpb1": dpb1, "dpw2": dpw2, "dpb2": dpb2,
        "w_all": w_all, "b_all": b_all, "v_blk": v_blk,
        "fw": fw, "fb": fb,
        "branches": branches,    # raw per-branch params (used only by the pure-JAX reference)
    }


# ------------------------- pure-JAX reference (sanity check) -------------------------

def reference(x, mask, params):
    x = x.astype(jnp.float32)
    mask = mask.astype(jnp.float32)
    hp = jax.lax.Precision.HIGHEST
    pooled_outs = []
    for br in params["branches"]:
        ah = jnp.tanh(jnp.einsum("bsh,ha->bsa", x, br["w"], precision=hp) + br["b"])
        scores = jnp.einsum("bsa,a->bs", ah, br["v"], precision=hp)
        scores = jnp.where(mask == 0.0, -1e9, scores)
        wts = jax.nn.softmax(scores, axis=1)
        pooled_outs.append(jnp.sum(x * wts[:, :, None], axis=1))
    concat = jnp.concatenate(pooled_outs, axis=-1)
    return jnp.dot(concat, params["fw"], precision=hp) + params["fb"]


# ------------------------- main -------------------------

if __name__ == "__main__":
    B, S, H = 2, 8, 32
    min_attention_dim, max_attention_dim = 8, 16
    attn_dims = [min_attention_dim,
                 (min_attention_dim + max_attention_dim) // 2,
                 max_attention_dim]  # [8, 12, 16]

    key = jax.random.PRNGKey(0)
    k_x, k_p = jax.random.split(key)

    x = jax.random.normal(k_x, (B, S, H), jnp.float32)
    # attention mask: first sample fully valid, second sample has 3 padding positions
    mask = jnp.array([[1, 1, 1, 1, 1, 1, 1, 1],
                      [1, 1, 1, 1, 1, 0, 0, 0]], jnp.float32)

    params = init_params(k_p, H, attn_dims)

    fused, dim_w = adaptive_attention_pooling(x, mask, params)
    fused = jax.block_until_ready(fused)
    dim_w = jax.block_until_ready(dim_w)

    ref = reference(x, mask, params)
    assert fused.shape == (B, H)
    assert dim_w.shape == (B, 1)
    assert jnp.allclose(fused, ref, rtol=1e-3, atol=1e-3), "mismatch vs reference"

    print("KERNEL_OK")
</pallas_src>

<mosaic_0001>
module attributes {stable_mosaic.version = 11 : i64} {
  func.func @adaptive_attention_pooling_kernel(%arg0: i32, %arg1: memref<2x8x32xf32, #tpu.memory_space<vmem>>, %arg2: memref<2x8x1xf32, #tpu.memory_space<vmem>>, %arg3: memref<32x36xf32, #tpu.memory_space<vmem>>, %arg4: memref<1x36xf32, #tpu.memory_space<vmem>>, %arg5: memref<36x3xf32, #tpu.memory_space<vmem>>, %arg6: memref<96x32xf32, #tpu.memory_space<vmem>>, %arg7: memref<1x32xf32, #tpu.memory_space<vmem>>, %arg8: memref<2x32xf32, #tpu.memory_space<vmem>>) attributes {dimension_semantics = [#tpu.dimension_semantics<parallel>], iteration_bounds = array<i64: 1>, scalar_prefetch = 0 : i64, scratch_operands = 0 : i64, tpu.core_type = #tpu.core_type<tc>, window_params = [{transform_indices = @transform_0, window_bounds = array<i64: 2, 8, 32>}, {transform_indices = @transform_1, window_bounds = array<i64: 2, 8, 1>}, {pipeline_mode = #tpu.pipeline_mode<synchronous>, transform_indices = @transform_2, window_bounds = array<i64: 32, 36>}, {pipeline_mode = #tpu.pipeline_mode<synchronous>, transform_indices = @transform_3, window_bounds = array<i64: 1, 36>}, {pipeline_mode = #tpu.pipeline_mode<synchronous>, transform_indices = @transform_4, window_bounds = array<i64: 36, 3>}, {pipeline_mode = #tpu.pipeline_mode<synchronous>, transform_indices = @transform_5, window_bounds = array<i64: 96, 32>}, {pipeline_mode = #tpu.pipeline_mode<synchronous>, transform_indices = @transform_6, window_bounds = array<i64: 1, 32>}, {transform_indices = @transform_7, window_bounds = array<i64: 2, 32>}]} {
    %c0 = arith.constant 0 : index
    %c0_0 = arith.constant 0 : index
    %c0_1 = arith.constant 0 : index
    %0 = vector.load %arg1[%c0, %c0_0, %c0_1] : memref<2x8x32xf32, #tpu.memory_space<vmem>>, vector<2x8x32xf32>
    %1 = vector.shape_cast %0 : vector<2x8x32xf32> to vector<16x32xf32>
    %c0_2 = arith.constant 0 : index
    %c0_3 = arith.constant 0 : index
    %2 = vector.load %arg3[%c0_2, %c0_3] : memref<32x36xf32, #tpu.memory_space<vmem>>, vector<32x36xf32>
    %cst = arith.constant dense<0.000000e+00> : vector<16x36xf32>
    %3 = tpu.matmul %1, %2, %cst {dimension_numbers = #tpu.dot_dimension_numbers<[1], [0], [0], [1], [0, 0, 1, 1], [], []>} : vector<16x32xf32>, vector<32x36xf32>, vector<16x36xf32> -> vector<16x36xf32>
    %c0_4 = arith.constant 0 : index
    %c0_5 = arith.constant 0 : index
    %4 = vector.load %arg4[%c0_4, %c0_5] : memref<1x36xf32, #tpu.memory_space<vmem>>, vector<1x36xf32>
    %5 = vector.broadcast %4 : vector<1x36xf32> to vector<16x36xf32>
    %6 = arith.addf %3, %5 : vector<16x36xf32>
    %7 = math.tanh %6 : vector<16x36xf32>
    %c0_6 = arith.constant 0 : index
    %c0_7 = arith.constant 0 : index
    %8 = vector.load %arg5[%c0_6, %c0_7] : memref<36x3xf32, #tpu.memory_space<vmem>>, vector<36x3xf32>
    %cst_8 = arith.constant dense<0.000000e+00> : vector<16x3xf32>
    %9 = tpu.matmul %7, %8, %cst_8 {dimension_numbers = #tpu.dot_dimension_numbers<[1], [0], [0], [1], [0, 0, 1, 1], [], []>} : vector<16x36xf32>, vector<36x3xf32>, vector<16x3xf32> -> vector<16x3xf32>
    %10 = vector.shape_cast %9 : vector<16x3xf32> to vector<2x8x3xf32>
    %c0_9 = arith.constant 0 : index
    %c0_10 = arith.constant 0 : index
    %c0_11 = arith.constant 0 : index
    %11 = vector.load %arg2[%c0_9, %c0_10, %c0_11] : memref<2x8x1xf32, #tpu.memory_space<vmem>>, vector<2x8x1xf32>
    %12 = vector.broadcast %11 : vector<2x8x1xf32> to vector<2x8x3xf32>
    %13 = arith.addf %10, %12 : vector<2x8x3xf32>
    %cst_12 = arith.constant dense<0xFF800000> : vector<2x3xf32>
    %14 = vector.multi_reduction <maximumf>, %13, %cst_12 [1] : vector<2x8x3xf32> to vector<2x3xf32>
    %15 = vector.shape_cast %14 : vector<2x3xf32> to vector<2x1x3xf32>
    %16 = vector.broadcast %15 : vector<2x1x3xf32> to vector<2x8x3xf32>
    %17 = arith.subf %13, %16 : vector<2x8x3xf32>
    %18 = math.exp %17 : vector<2x8x3xf32>
    %cst_13 = arith.constant dense<0.000000e+00> : vector<2x3xf32>
    %19 = vector.multi_reduction <add>, %18, %cst_13 [1] : vector<2x8x3xf32> to vector<2x3xf32>
    %20 = vector.shape_cast %19 : vector<2x3xf32> to vector<2x1x3xf32>
    %21 = vector.broadcast %20 : vector<2x1x3xf32> to vector<2x8x3xf32>
    %22 = arith.divf %18, %21 : vector<2x8x3xf32>
    %23 = tpu.transpose %22, [0, 2, 1] : vector<2x8x3xf32> -> vector<2x3x8xf32>
    "tpu.trace_start"() <{level = 10 : i32, message = "bks,bsh->bkh"}> : () -> ()
    %cst_14 = arith.constant dense<0.000000e+00> : vector<2x3x32xf32>
    %24 = tpu.matmul %23, %0, %cst_14 {dimension_numbers = #tpu.dot_dimension_numbers<[2], [1], [1], [2], [0, 0, 0, 1, 1, 2], [0], [0]>} : vector<2x3x8xf32>, vector<2x8x32xf32>, vector<2x3x32xf32> -> vector<2x3x32xf32>
    "tpu.trace_stop"() : () -> ()
    %c0_15 = arith.constant 0 : index
    %c0_16 = arith.constant 0 : index
    %25 = vector.load %arg7[%c0_15, %c0_16] : memref<1x32xf32, #tpu.memory_space<vmem>>, vector<1x32xf32>
    %26 = vector.extract_strided_slice %24 {offsets = [0, 0, 0], sizes = [2, 1, 32], strides = [1, 1, 1]} : vector<2x3x32xf32> to vector<2x1x32xf32>
    %27 = vector.shape_cast %26 : vector<2x1x32xf32> to vector<2x32xf32>
    %c0_17 = arith.constant 0 : index
    %c0_18 = arith.constant 0 : index
    %28 = vector.load %arg6[%c0_17, %c0_18] : memref<96x32xf32, #tpu.memory_space<vmem>>, vector<32x32xf32>
    %cst_19 = arith.constant dense<0.000000e+00> : vector<2x32xf32>
    %29 = tpu.matmul %27, %28, %cst_19 {dimension_numbers = #tpu.dot_dimension_numbers<[1], [0], [0], [1], [0, 0, 1, 1], [], []>} : vector<2x32xf32>, vector<32x32xf32>, vector<2x32xf32> -> vector<2x32xf32>
    %30 = vector.broadcast %25 : vector<1x32xf32> to vector<2x32xf32>
    %31 = arith.addf %30, %29 : vector<2x32xf32>
    %32 = vector.extract_strided_slice %24 {offsets = [0, 1, 0], sizes = [2, 1, 32], strides = [1, 1, 1]} : vector<2x3x32xf32> to vector<2x1x32xf32>
    %33 = vector.shape_cast %32 : vector<2x1x32xf32> to vector<2x32xf32>
    %c32 = arith.constant 32 : index
    %c0_20 = arith.constant 0 : index
    %34 = vector.load %arg6[%c32, %c0_20] : memref<96x32xf32, #tpu.memory_space<vmem>>, vector<32x32xf32>
    %cst_21 = arith.constant dense<0.000000e+00> : vector<2x32xf32>
    %35 = tpu.matmul %33, %34, %cst_21 {dimension_numbers = #tpu.dot_dimension_numbers<[1], [0], [0], [1], [0, 0, 1, 1], [], []>} : vector<2x32xf32>, vector<32x32xf32>, vector<2x32xf32> -> vector<2x32xf32>
    %36 = arith.addf %31, %35 : vector<2x32xf32>
    %37 = vector.extract_strided_slice %24 {offsets = [0, 2, 0], sizes = [2, 1, 32], strides = [1, 1, 1]} : vector<2x3x32xf32> to vector<2x1x32xf32>
    %38 = vector.shape_cast %37 : vector<2x1x32xf32> to vector<2x32xf32>
    %c64 = arith.constant 64 : index
    %c0_22 = arith.constant 0 : index
    %39 = vector.load %arg6[%c64, %c0_22] : memref<96x32xf32, #tpu.memory_space<vmem>>, vector<32x32xf32>
    %cst_23 = arith.constant dense<0.000000e+00> : vector<2x32xf32>
    %40 = tpu.matmul %38, %39, %cst_23 {dimension_numbers = #tpu.dot_dimension_numbers<[1], [0], [0], [1], [0, 0, 1, 1], [], []>} : vector<2x32xf32>, vector<32x32xf32>, vector<2x32xf32> -> vector<2x32xf32>
    %41 = arith.addf %36, %40 : vector<2x32xf32>
    %c0_24 = arith.constant 0 : index
    %c0_25 = arith.constant 0 : index
    %42 = vector.load %arg8[%c0_24, %c0_25] : memref<2x32xf32, #tpu.memory_space<vmem>>, vector<2x32xf32>
    tpu.vector_store %arg8[%c0_24, %c0_25], %41 {strides = array<i32>} : memref<2x32xf32, #tpu.memory_space<vmem>>, vector<2x32xf32>,
    return
  }
  func.func @transform_0(%arg0: i32) -> (i32, i32, i32) {
    %c0_i32 = arith.constant 0 : i32
    %c0_i32_0 = arith.constant 0 : i32
    %c0_i32_1 = arith.constant 0 : i32
    return %arg0, %c0_i32, %c0_i32_0 : i32, i32, i32
  }
  func.func @transform_1(%arg0: i32) -> (i32, i32, i32) {
    %c0_i32 = arith.constant 0 : i32
    %c0_i32_0 = arith.constant 0 : i32
    %c0_i32_1 = arith.constant 0 : i32
    return %arg0, %c0_i32, %c0_i32_0 : i32, i32, i32
  }
  func.func @transform_2(%arg0: i32) -> (i32, i32) {
    %c0_i32 = arith.constant 0 : i32
    %c0_i32_0 = arith.constant 0 : i32
    %c0_i32_1 = arith.constant 0 : i32
    return %c0_i32, %c0_i32_0 : i32, i32
  }
  func.func @transform_3(%arg0: i32) -> (i32, i32) {
    %c0_i32 = arith.constant 0 : i32
    %c0_i32_0 = arith.constant 0 : i32
    %c0_i32_1 = arith.constant 0 : i32
    return %c0_i32, %c0_i32_0 : i32, i32
  }
  func.func @transform_4(%arg0: i32) -> (i32, i32) {
    %c0_i32 = arith.constant 0 : i32
    %c0_i32_0 = arith.constant 0 : i32
    %c0_i32_1 = arith.constant 0 : i32
    return %c0_i32, %c0_i32_0 : i32, i32
  }
  func.func @transform_5(%arg0: i32) -> (i32, i32) {
    %c0_i32 = arith.constant 0 : i32
    %c0_i32_0 = arith.constant 0 : i32
    %c0_i32_1 = arith.constant 0 : i32
    return %c0_i32, %c0_i32_0 : i32, i32
  }
  func.func @transform_6(%arg0: i32) -> (i32, i32) {
    %c0_i32 = arith.constant 0 : i32
    %c0_i32_0 = arith.constant 0 : i32
    %c0_i32_1 = arith.constant 0 : i32
    return %c0_i32, %c0_i32_0 : i32, i32
  }
  func.func @transform_7(%arg0: i32) -> (i32, i32) {
    %c0_i32 = arith.constant 0 : i32
    %c0_i32_0 = arith.constant 0 : i32
    return %arg0, %c0_i32 : i32, i32
  }
}

</mosaic_0001>

<llo_original>
// kernel: tpu_custom_call.1
$region0: #{tpu_custom_call.1}
  #allocation0 [shape = 'u32[]', space=smem, size = 0x4, offset = 0x4, fixed_abs, tag = 'smem constant byte address 0x4 - core index']
  #allocation1 [shape = 'u32[72,128]{1,0:T(1,128)}', space=vmem, size = 0x9000, scoped, tag = 'internal scratch']
  %s0 = inlined_call_operand.vmem [shape: f32[2,8,32], index: 0, kind: input, shape index: {}]
  %s1 = inlined_call_operand.vmem [shape: f32[2,8,1], index: 1, kind: input, shape index: {}]
  %s2 = inlined_call_operand.vmem [shape: f32[32,36], index: 2, kind: input, shape index: {}]
  %s3 = inlined_call_operand.vmem [shape: f32[1,36], index: 3, kind: input, shape index: {}]
  %s4 = inlined_call_operand.vmem [shape: f32[36,3], index: 4, kind: input, shape index: {}]
  %s5 = inlined_call_operand.vmem [shape: f32[96,32], index: 5, kind: input, shape index: {}]
  %s6 = inlined_call_operand.vmem [shape: f32[1,32], index: 6, kind: input, shape index: {}]
  %s7 = inlined_call_operand.hbm [shape: f32[2,32], index: 7, kind: output, shape index: {}]
  %s8 = sld [smem:[#allocation0]]
  $region38: #{tpu_custom_call.1} parent=0
    _
  %s10 = ssub.s32 1, %s8
  %s11 = scalar_select 0, %s10, %s8
  $region1: #{tpu_custom_call.1} parent=0
    #allocation2 [shape = 'u8[1024]{0}', space=vmem, size = 0x400, scoped, tag = 'output window, operand 0, single buffered']
    #allocation3 [shape = 's32[1]{0}', space=sflag, size = 0x4, scoped, tag = 'scoped memory for tpu_custom_call.1']
    %12 = vsyncpa [#allocation3], 0
    // Predicated region
    $region2: #{tpu_custom_call.1} parent=1 // pred_check
      _
    $region3: #{tpu_custom_call.1} parent=1 // pred_check_branch
      %14 = sbr.rel (0) target = $region5
    $region4: #{tpu_custom_call.1} parent=1 // pred_region
      _
    $region5: #{tpu_custom_call.1} parent=1 // pred_fallthru
      _
    // Predicated region
    $region6: #{tpu_custom_call.1} parent=1 // pred_check
      _
    $region7: #{tpu_custom_call.1} parent=1 // pred_check_branch
      %16 = sbr.rel (0) target = $region9
    $region8: #{tpu_custom_call.1} parent=1 // pred_region
      _
    $region9: #{tpu_custom_call.1} parent=1 // pred_fallthru
      _
    // Predicated region
    $region10: #{tpu_custom_call.1} parent=1 // pred_check
      _
    $region11: #{tpu_custom_call.1} parent=1 // pred_check_branch
      %18 = sbr.rel (0) target = $region13
    $region12: #{tpu_custom_call.1} parent=1 // pred_region
      _
    $region13: #{tpu_custom_call.1} parent=1 // pred_fallthru
      _
    // Predicated region
    $region14: #{tpu_custom_call.1} parent=1 // pred_check
      _
    $region15: #{tpu_custom_call.1} parent=1 // pred_check_branch
      %20 = sbr.rel (0) target = $region17
    $region16: #{tpu_custom_call.1} parent=1 // pred_region
      _
    $region17: #{tpu_custom_call.1} parent=1 // pred_fallthru
      _
    // Predicated region
    $region18: #{tpu_custom_call.1} parent=1 // pred_check
      _
    $region19: #{tpu_custom_call.1} parent=1 // pred_check_branch
      %22 = sbr.rel (0) target = $region21
    $region20: #{tpu_custom_call.1} parent=1 // pred_region
      _
    $region21: #{tpu_custom_call.1} parent=1 // pred_fallthru
      _
    // Predicated region
    $region22: #{tpu_custom_call.1} parent=1 // pred_check
      _
    $region23: #{tpu_custom_call.1} parent=1 // pred_check_branch
      %24 = sbr.rel (0) target = $region25
    $region24: #{tpu_custom_call.1} parent=1 // pred_region
      _
    $region25: #{tpu_custom_call.1} parent=1 // pred_fallthru
      _
    // Predicated region
    $region26: #{tpu_custom_call.1} parent=1 // pred_check
      _
    $region27: #{tpu_custom_call.1} parent=1 // pred_check_branch
      %26 = sbr.rel (0) target = $region29
    $region28: #{tpu_custom_call.1} parent=1 // pred_region
      _
    $region29: #{tpu_custom_call.1} parent=1 // pred_fallthru
      _
    %v27 = vld [vmem:[%s0] sm:$0xff]
    %v28 = vld [vmem:[%s0 + $0x8] sm:$0xff]
    %v29 = vld [vmem:[%s2] sm:$0xff]
    %v30 = vld [vmem:[%s2 + $0x8] sm:$0xff]
    %v31 = vld [vmem:[%s2 + $0x10] sm:$0xff]
    %v32 = vld [vmem:[%s2 + $0x18] sm:$0xff]
    %v33 = vld [vmem:[%s3] sm:$0x1]
    %v35 = vperm.slane %v33, 0
    %vm37 = vcmask 261120
    %v39 = vsel %vm37, %v27, 0
    %v42 = vsel %vm37, %v28, 0
    %44 = vmatpush.msra.mxu0 0.0
    %45 = vmatpush.msra.mxu0 0.0
    %46 = vmatpush.msra.mxu0 0.0
    %47 = vmatpush.msra.mxu0 0.0
    %48 = vmatpush.msra.mxu0 0.0
    %49 = vmatpush.msra.mxu0 0.0
    %50 = vmatpush.msra.mxu0 0.0
    %51 = vmatpush.msra.mxu0 0.0
    %52 = vmatpush.msra.mxu0 0.0
    %53 = vmatpush.msra.mxu0 0.0
    %54 = vmatpush.msra.mxu0 0.0
    %55 = vmatpush.msra.mxu0 0.0
    %56 = vmatpush.msra.mxu0 %v32
    %57 = vmatpush.msra.mxu0 %v31
    %58 = vmatpush.msra.mxu0 %v30
    %59 = vmatpush.msra.mxu0 %v29
    %60 = vmatmul.f32.gmra.mxu0 %v39
    %v61 = vpop.f32.mrf.mxu0
    %v62 = vadd.f32 %v35, %v61
    %63 = vmatmul.f32.gmra.mxu0 %v42
    %v64 = vpop.f32.mrf.mxu0
    %v65 = vadd.f32 %v35, %v64
    %66 = vdwg.mxu0
    %v67 = vtanh.pop %v62
    %v68 = vtanh.pop %v65
    %v69 = vld [vmem:[%s4] sm:$0xff]
    %v70 = vld [vmem:[%s4 + $0x8] sm:$0xff]
    %v71 = vld [vmem:[%s4 + $0x10] sm:$0xff]
    %v72 = vld [vmem:[%s4 + $0x18] sm:$0xff]
    %v73 = vld [vmem:[%s4 + $0x20] sm:$0xf]
    %vm74 = vcmask 293888
    %v76 = vsel %vm74, %v67, 0
    %v79 = vsel %vm74, %v68, 0
    %vm81 = vcmask 1043456
    %v83 = vsel %vm81, %v73, 0
    %85 = vmatpush.msra.mxu0 0.0
    %86 = vmatpush.msra.mxu0 0.0
    %87 = vmatpush.msra.mxu0 0.0
    %88 = vmatpush.msra.mxu0 0.0
    %89 = vmatpush.msra.mxu0 0.0
    %90 = vmatpush.msra.mxu0 0.0
    %91 = vmatpush.msra.mxu0 0.0
    %92 = vmatpush.msra.mxu0 0.0
    %93 = vmatpush.msra.mxu0 0.0
    %94 = vmatpush.msra.mxu0 0.0
    %95 = vmatpush.msra.mxu0 0.0
    %96 = vmatpush.msra.mxu0 %v83
    %97 = vmatpush.msra.mxu0 %v72
    %98 = vmatpush.msra.mxu0 %v71
    %99 = vmatpush.msra.mxu0 %v70
    %100 = vmatpush.msra.mxu0 %v69
    %101 = vmatmul.f32.gmra.mxu0 %v76
    %v102 = vpop.f32.mrf.mxu0
    %v103 = vadd.f32 0.0, %v102
    %104 = vmatmul.f32.gmra.mxu0 %v79
    %v105 = vpop.f32.mrf.mxu0
    %v106 = vadd.f32 0.0, %v105
    %107 = vdwg.mxu0
    %v108 = vld [vmem:[%s1] sm:$0xff]
    %v109 = vld [vmem:[%s1 + $0x8] sm:$0xff]
    %111 = vset.pattern.permute.xlu0 0
    %112 = vperm.xlu0 %111, %v108
    %v113 = vpop.permute.xlu0 %112
    %116 = vset.pattern.permute.xlu0 0
    %117 = vperm.xlu0 %116, %v109
    %v118 = vpop.permute.xlu0 %117
    %v120 = vadd.f32 %v103, %v113
    %v121 = vadd.f32 %v106, %v118
    %vm122 = vcmask 23552
    %v123 = vsel %vm122, %v120, -inf
    %v124 = vrot.slane %v123, 4
    %v125 = vmax.f32 %v123, %v124
    %v126 = vrot.slane %v125, 2
    %v127 = vmax.f32 %v125, %v126
    %v128 = vrot.slane %v127, 1
    %v129 = vmax.f32 %v127, %v128
    %v130 = vsel %vm122, %v121, -inf
    %v131 = vrot.slane %v130, 4
    %v132 = vmax.f32 %v130, %v131
    %v133 = vrot.slane %v132, 2
    %v134 = vmax.f32 %v132, %v133
    %v135 = vrot.slane %v134, 1
    %v136 = vmax.f32 %v134, %v135
    %v137 = vsub.f32 %v120, %v129
    %v138 = vsub.f32 %v121, %v136
    %v139 = vmul.f32 %v137, 1.442695
    %v140 = vpow.pop %v139
    %v141 = vmul.f32 %v138, 1.442695
    %v142 = vpow.pop %v141
    %v143 = vsel %vm122, %v140, 0.0
    %v144 = vrot.slane %v143, 4
    %v145 = vadd.f32 %v143, %v144
    %v146 = vrot.slane %v145, 2
    %v147 = vadd.f32 %v145, %v146
    %v148 = vrot.slane %v147, 1
    %v149 = vadd.f32 %v147, %v148
    %v150 = vsel %vm122, %v142, 0.0
    %v151 = vrot.slane %v150, 4
    %v152 = vadd.f32 %v150, %v151
    %v153 = vrot.slane %v152, 2
    %v154 = vadd.f32 %v152, %v153
    %v155 = vrot.slane %v154, 1
    %v156 = vadd.f32 %v154, %v155
    %v157 = vrcp.pop %v149
    %v158 = vmul.f32 %v149, %v157
    %v159 = vsub.f32 1.0, %v158
    %v160 = vmul.f32 %v157, %v159
    %v161 = vadd.f32 %v157, %v160
    %vm162 = vweird.f32 %v149
    %vm163 = vweird.f32 %v157
    %vm164 = vmor %vm162, %vm163
    %v165 = vsel %vm164, %v157, %v161
    %v166 = vand.u32 2147483647, %v149
    %vm167 = vcmp.eq.f32.partialorder %v166, 8.507059e+37
    %v168 = vand.u32 %v149, 2147483648
    %v169 = vor.u32 1.1754944e-38, %v168
    %v170 = vsel %vm167, %v169, %v165
    %v171 = vmul.f32 %v140, %v170
    %v172 = vrcp.pop %v156
    %v173 = vmul.f32 %v156, %v172
    %v174 = vsub.f32 1.0, %v173
    %v175 = vmul.f32 %v172, %v174
    %v176 = vadd.f32 %v172, %v175
    %vm177 = vweird.f32 %v156
    %vm178 = vweird.f32 %v172
    %vm179 = vmor %vm177, %vm178
    %v180 = vsel %vm179, %v172, %v176
    %v181 = vand.u32 2147483647, %v156
    %vm182 = vcmp.eq.f32.partialorder %v181, 8.507059e+37
    %v183 = vand.u32 %v156, 2147483648
    %v184 = vor.u32 1.1754944e-38, %v183
    %v185 = vsel %vm182, %v184, %v180
    %v186 = vmul.f32 %v142, %v185
    %187 = vxpose.xlu0.b32.start [1/16] %v171, 128
    %188 = vxpose.xlu0.b32.cont [2/16] 0.0, 128
    %189 = vxpose.xlu0.b32.cont [3/16] 0.0, 128
    %190 = vxpose.xlu0.b32.cont [4/16] 0.0, 128
    %191 = vxpose.xlu0.b32.cont [5/16] 0.0, 128
    %192 = vxpose.xlu0.b32.cont [6/16] 0.0, 128
    %193 = vxpose.xlu0.b32.cont [7/16] 0.0, 128
    %194 = vxpose.xlu0.b32.cont [8/16] 0.0, 128
    %195 = vxpose.xlu0.b32.cont [9/16] 0.0, 128
    %196 = vxpose.xlu0.b32.cont [10/16] 0.0, 128
    %197 = vxpose.xlu0.b32.cont [11/16] 0.0, 128
    %198 = vxpose.xlu0.b32.cont [12/16] 0.0, 128
    %199 = vxpose.xlu0.b32.cont [13/16] 0.0, 128
    %200 = vxpose.xlu0.b32.cont [14/16] 0.0, 128
    %201 = vxpose.xlu0.b32.cont [15/16] 0.0, 128
    %202 = vxpose.xlu0.b32.end [16/16] 0.0, 128
    %v203 = vpop.trf.xlu0
    %v204 = vpop.trf.xlu0
    %v205 = vpop.trf.xlu0
    %v206 = vpop.trf.xlu0
    %v207 = vpop.trf.xlu0
    %v208 = vpop.trf.xlu0
    %v209 = vpop.trf.xlu0
    %v210 = vpop.trf.xlu0
    %v211 = vpop.trf.xlu0
    %v212 = vpop.trf.xlu0
    %v213 = vpop.trf.xlu0
    %v214 = vpop.trf.xlu0
    %v215 = vpop.trf.xlu0
    %v216 = vpop.trf.xlu0
    %v217 = vpop.trf.xlu0
    %v218 = vpop.trf.xlu0
    %219 = vxpose.xlu0.b32.start [1/16] %v186, 128
    %220 = vxpose.xlu0.b32.cont [2/16] 0.0, 128
    %221 = vxpose.xlu0.b32.cont [3/16] 0.0, 128
    %222 = vxpose.xlu0.b32.cont [4/16] 0.0, 128
    %223 = vxpose.xlu0.b32.cont [5/16] 0.0, 128
    %224 = vxpose.xlu0.b32.cont [6/16] 0.0, 128
    %225 = vxpose.xlu0.b32.cont [7/16] 0.0, 128
    %226 = vxpose.xlu0.b32.cont [8/16] 0.0, 128
    %227 = vxpose.xlu0.b32.cont [9/16] 0.0, 128
    %228 = vxpose.xlu0.b32.cont [10/16] 0.0, 128
    %229 = vxpose.xlu0.b32.cont [11/16] 0.0, 128
    %230 = vxpose.xlu0.b32.cont [12/16] 0.0, 128
    %231 = vxpose.xlu0.b32.cont [13/16] 0.0, 128
    %232 = vxpose.xlu0.b32.cont [14/16] 0.0, 128
    %233 = vxpose.xlu0.b32.cont [15/16] 0.0, 128
    %234 = vxpose.xlu0.b32.end [16/16] 0.0, 128
    %v235 = vpop.trf.xlu0
    %v236 = vpop.trf.xlu0
    %v237 = vpop.trf.xlu0
    %v238 = vpop.trf.xlu0
    %v239 = vpop.trf.xlu0
    %v240 = vpop.trf.xlu0
    %v241 = vpop.trf.xlu0
    %v242 = vpop.trf.xlu0
    %v243 = vpop.trf.xlu0
    %v244 = vpop.trf.xlu0
    %v245 = vpop.trf.xlu0
    %v246 = vpop.trf.xlu0
    %v247 = vpop.trf.xlu0
    %v248 = vpop.trf.xlu0
    %v249 = vpop.trf.xlu0
    %v250 = vpop.trf.xlu0
    %vm251 = vcmask 64512
    %v253 = vsel %vm251, %v203, 0
    %255 = vmatpush.msra.mxu0 0.0
    %256 = vmatpush.msra.mxu0 0.0
    %257 = vmatpush.msra.mxu0 0.0
    %258 = vmatpush.msra.mxu0 0.0
    %259 = vmatpush.msra.mxu0 0.0
    %260 = vmatpush.msra.mxu0 0.0
    %261 = vmatpush.msra.mxu0 0.0
    %262 = vmatpush.msra.mxu0 0.0
    %263 = vmatpush.msra.mxu0 0.0
    %264 = vmatpush.msra.mxu0 0.0
    %265 = vmatpush.msra.mxu0 0.0
    %266 = vmatpush.msra.mxu0 0.0
    %267 = vmatpush.msra.mxu0 0.0
    %268 = vmatpush.msra.mxu0 0.0
    %269 = vmatpush.msra.mxu0 0.0
    %270 = vmatpush.msra.mxu0 %v27
    %271 = vmatmul.f32.gmra.mxu0 %v253
    %v272 = vpop.f32.mrf.mxu0
    %v273 = vadd.f32 0.0, %v272
    %274 = vdwg.mxu0
    %v276 = vsel %vm251, %v235, 0
    %278 = vmatpush.msra.mxu0 0.0
    %279 = vmatpush.msra.mxu0 0.0
    %280 = vmatpush.msra.mxu0 0.0
    %281 = vmatpush.msra.mxu0 0.0
    %282 = vmatpush.msra.mxu0 0.0
    %283 = vmatpush.msra.mxu0 0.0
    %284 = vmatpush.msra.mxu0 0.0
    %285 = vmatpush.msra.mxu0 0.0
    %286 = vmatpush.msra.mxu0 0.0
    %287 = vmatpush.msra.mxu0 0.0
    %288 = vmatpush.msra.mxu0 0.0
    %289 = vmatpush.msra.mxu0 0.0
    %290 = vmatpush.msra.mxu0 0.0
    %291 = vmatpush.msra.mxu0 0.0
    %292 = vmatpush.msra.mxu0 0.0
    %293 = vmatpush.msra.mxu0 %v28
    %294 = vmatmul.f32.gmra.mxu0 %v276
    %v295 = vpop.f32.mrf.mxu0
    %v296 = vadd.f32 0.0, %v295
    %297 = vdwg.mxu0
    %v298 = vld [vmem:[%s6] sm:$0x1]
    %v299 = vld [vmem:[%s5] sm:$0xff]
    %v300 = vld [vmem:[%s5 + $0x8] sm:$0xff]
    %v301 = vld [vmem:[%s5 + $0x10] sm:$0xff]
    %v302 = vld [vmem:[%s5 + $0x18] sm:$0xff]
    %v305 = vrot.slane %v296, 7
    %vm306 = vcmask 1041409
    %v307 = vsel %vm306, %v305, %v273
    %v308 = vsel %vm37, %v307, 0
    %310 = vmatpush.msra.mxu0 0.0
    %311 = vmatpush.msra.mxu0 0.0
    %312 = vmatpush.msra.mxu0 0.0
    %313 = vmatpush.msra.mxu0 0.0
    %314 = vmatpush.msra.mxu0 0.0
    %315 = vmatpush.msra.mxu0 0.0
    %316 = vmatpush.msra.mxu0 0.0
    %317 = vmatpush.msra.mxu0 0.0
    %318 = vmatpush.msra.mxu0 0.0
    %319 = vmatpush.msra.mxu0 0.0
    %320 = vmatpush.msra.mxu0 0.0
    %321 = vmatpush.msra.mxu0 0.0
    %322 = vmatpush.msra.mxu0 %v302
    %323 = vmatpush.msra.mxu0 %v301
    %324 = vmatpush.msra.mxu0 %v300
    %325 = vmatpush.msra.mxu0 %v299
    %326 = vmatmul.f32.gmra.mxu0 %v308
    %v327 = vpop.f32.mrf.mxu0
    %v328 = vadd.f32 0.0, %v327
    %329 = vdwg.mxu0
    %v331 = vperm.slane %v298, 0
    %v333 = vadd.f32 %v331, %v328
    %v334 = vld [vmem:[%s5 + $0x20] sm:$0xff]
    %v335 = vld [vmem:[%s5 + $0x28] sm:$0xff]
    %v336 = vld [vmem:[%s5 + $0x30] sm:$0xff]
    %v337 = vld [vmem:[%s5 + $0x38] sm:$0xff]
    %v338 = vrot.slane %v273, 1
    %v339 = vsel %vm306, %v296, %v338
    %v340 = vsel %vm37, %v339, 0
    %342 = vmatpush.msra.mxu0 0.0
    %343 = vmatpush.msra.mxu0 0.0
    %344 = vmatpush.msra.mxu0 0.0
    %345 = vmatpush.msra.mxu0 0.0
    %346 = vmatpush.msra.mxu0 0.0
    %347 = vmatpush.msra.mxu0 0.0
    %348 = vmatpush.msra.mxu0 0.0
    %349 = vmatpush.msra.mxu0 0.0
    %350 = vmatpush.msra.mxu0 0.0
    %351 = vmatpush.msra.mxu0 0.0
    %352 = vmatpush.msra.mxu0 0.0
    %353 = vmatpush.msra.mxu0 0.0
    %354 = vmatpush.msra.mxu0 %v337
    %355 = vmatpush.msra.mxu0 %v336
    %356 = vmatpush.msra.mxu0 %v335
    %357 = vmatpush.msra.mxu0 %v334
    %358 = vmatmul.f32.gmra.mxu0 %v340
    %v359 = vpop.f32.mrf.mxu0
    %v360 = vadd.f32 0.0, %v359
    %361 = vdwg.mxu0
    %v362 = vadd.f32 %v333, %v360
    %v363 = vld [vmem:[%s5 + $0x40] sm:$0xff]
    %v364 = vld [vmem:[%s5 + $0x48] sm:$0xff]
    %v365 = vld [vmem:[%s5 + $0x50] sm:$0xff]
    %v366 = vld [vmem:[%s5 + $0x58] sm:$0xff]
    %v367 = vrot.slane %v273, 2
    %v368 = vrot.slane %v296, 1
    %v369 = vsel %vm306, %v368, %v367
    %v370 = vsel %vm37, %v369, 0
    %372 = vmatpush.msra.mxu0 0.0
    %373 = vmatpush.msra.mxu0 0.0
    %374 = vmatpush.msra.mxu0 0.0
    %375 = vmatpush.msra.mxu0 0.0
    %376 = vmatpush.msra.mxu0 0.0
    %377 = vmatpush.msra.mxu0 0.0
    %378 = vmatpush.msra.mxu0 0.0
    %379 = vmatpush.msra.mxu0 0.0
    %380 = vmatpush.msra.mxu0 0.0
    %381 = vmatpush.msra.mxu0 0.0
    %382 = vmatpush.msra.mxu0 0.0
    %383 = vmatpush.msra.mxu0 0.0
    %384 = vmatpush.msra.mxu0 %v366
    %385 = vmatpush.msra.mxu0 %v365
    %386 = vmatpush.msra.mxu0 %v364
    %387 = vmatpush.msra.mxu0 %v363
    %388 = vmatmul.f32.gmra.mxu0 %v370
    %v389 = vpop.f32.mrf.mxu0
    %v390 = vadd.f32 0.0, %v389
    %391 = vdwg.mxu0
    %v392 = vadd.f32 %v362, %v390
    %vm393 = vcmask 254976
    %394 = vst.msk [vmem:[#allocation2] sm:$0x3] %vm393, %v392
    // Predicated region
    $region30: #{tpu_custom_call.1} parent=1 // pred_check
      _
    $region31: #{tpu_custom_call.1} parent=1 // pred_check_branch
      %396 = sbr.rel (0) target = $region33
    $region32: #{tpu_custom_call.1} parent=1 // pred_region
      %398 = vsyncadd [#allocation3], 0
      %s400 = sshll.u32 [#allocation2], 4
      %s401 = int_to_ptr.vmem [resolvable:$true] %s400
      %s402 = sshll.u32 %s7, 4
      %s403 = int_to_ptr.hbm [resolvable:$true] %s402
      %405 = dma.vmem_to_hbm [thread:$0]  %s401, 32, %s403, [#allocation3]
    $region33: #{tpu_custom_call.1} parent=1 // pred_fallthru
      _
    // Predicated region
    $region34: #{tpu_custom_call.1} parent=1 // pred_check
      _
    $region35: #{tpu_custom_call.1} parent=1 // pred_check_branch
      %407 = sbr.rel (0) target = $region37
    $region36: #{tpu_custom_call.1} parent=1 // pred_region
      %409 = dma.done [#allocation3], 32
    $region37: #{tpu_custom_call.1} parent=1 // pred_fallthru
      _
    %410 = vsyncpa [#allocation3], 1

</llo_original>
